<compile_context>
chip_gen: v7x
topology: tpu7x:2x2x1
jax: 0.10.0
libtpu: 0.0.40
codegen_flags: <defaults>
</compile_context>

<pallas_src>
import functools

import jax
import jax.numpy as jnp
from jax.experimental import pallas as pl
from jax.experimental.pallas import tpu as pltpu

EPS = 1e-5  # default eps of BatchNorm1d / InstanceNorm1d


# ---------------------------------------------------------------------------
# In-kernel helpers
# ---------------------------------------------------------------------------
def _bn_rows(h):
    """BatchNorm1d (training) stats over rows, single-pass E[x]/E[x^2]."""
    m = jnp.mean(h, axis=0, keepdims=True)
    msq = jnp.mean(h * h, axis=0, keepdims=True)
    v = jnp.maximum(msq - m * m, 0.0)  # clamp tiny negatives before rsqrt
    return (h - m) * jax.lax.rsqrt(v + EPS)


# ---------------------------------------------------------------------------
# Kernel 1: AdjacencyModel (parameter-only; runs once per parameter set)
#   latent(1,E) -> Linear -> ReLU -> InstanceNorm1d -> Linear(AH, N*N)
# ---------------------------------------------------------------------------
def adjacency_kernel(latent_ref, w0_ref, b0_ref, w1_ref, b1_ref, o_ref):
    a = jnp.dot(latent_ref[...], w0_ref[...],
                preferred_element_type=jnp.float32) + b0_ref[...]
    a = jnp.maximum(a, 0.0)
    m = jnp.mean(a, axis=-1, keepdims=True)
    msq = jnp.mean(a * a, axis=-1, keepdims=True)
    v = jnp.maximum(msq - m * m, 0.0)
    a = (a - m) * jax.lax.rsqrt(v + EPS)
    o_ref[...] = jnp.dot(a, w1_ref[...],
                         preferred_element_type=jnp.float32) + b1_ref[...]


# ---------------------------------------------------------------------------
# Kernel 2: fused per-input forward (encoder -> G graph layers -> decoder)
#   Flat (B*N, *) layout throughout; adjacency arrives pre-normalized and
#   block-diagonal; P averages batch copies of each node for the graph BN.
# ---------------------------------------------------------------------------
def fused_forward_kernel(x_ref, adjbd_ref, pnode_ref,
                         we0_ref, ge_ref, be_ref, we1_ref, be1_ref,
                         wrel_ref, wroot_ref, gg_ref, bg_ref,
                         wd0_ref, gd_ref, bd_ref, wd1_ref, bd1_ref,
                         xlat_ref, recon_ref, *, G):
    f32 = jnp.float32

    # ---- NodeEncoder: Linear(no bias) -> ReLU -> BN(H) -> Linear+bias ----
    h = jnp.dot(x_ref[...], we0_ref[...], preferred_element_type=f32)
    h = jnp.maximum(h, 0.0)
    h = _bn_rows(h) * ge_ref[...] + be_ref[...]
    xg = jnp.dot(h, we1_ref[...], preferred_element_type=f32) + be1_ref[...]  # (BN,L)

    adj_bd = adjbd_ref[...]   # (BN, BN) block-diag, row-normalized (mean aggr)
    pnode = pnode_ref[...]    # (BN, BN) per-node batch-averaging matrix

    # ---- Graph layers (unrolled): DenseGraphConv(mean) -> ReLU -> BN(node) ----
    for g in range(G):
        agg = jnp.dot(adj_bd, xg, preferred_element_type=f32)            # (BN,L)
        hg = (jnp.dot(agg, wrel_ref[g], preferred_element_type=f32)
              + jnp.dot(xg, wroot_ref[g], preferred_element_type=f32))
        hg = jnp.maximum(hg, 0.0)
        # BatchNorm1d over channel=node axis: per-node stats over (batch, feat).
        # Lane-mean per row, then average the B copies of each node via P.
        m = jnp.mean(jnp.dot(pnode, hg, preferred_element_type=f32),
                     axis=-1, keepdims=True)                              # (BN,1)
        msq = jnp.mean(jnp.dot(pnode, hg * hg, preferred_element_type=f32),
                       axis=-1, keepdims=True)                            # (BN,1)
        v = jnp.maximum(msq - m * m, 0.0)
        xg = (hg - m) * jax.lax.rsqrt(v + EPS) * gg_ref[g] + bg_ref[g]

    xlat_ref[...] = xg

    # ---- NodeDecoder: Linear(no bias) -> ReLU -> BN(H) -> Linear+bias ----
    h = jnp.dot(xg, wd0_ref[...], preferred_element_type=f32)
    h = jnp.maximum(h, 0.0)
    h = _bn_rows(h) * gd_ref[...] + bd_ref[...]
    recon_ref[...] = jnp.dot(h, wd1_ref[...],
                             preferred_element_type=f32) + bd1_ref[...]


# ---------------------------------------------------------------------------
# Wrappers
# ---------------------------------------------------------------------------
def _vmem_specs(n):
    return [pl.BlockSpec(memory_space=pltpu.MemorySpace.VMEM) for _ in range(n)]


def compute_adjacency(params, cfg):
    """Parameter-only AdjacencyModel branch (Pallas kernel). Run once."""
    N = cfg['node_cnt']
    a = pl.pallas_call(
        adjacency_kernel,
        out_shape=jax.ShapeDtypeStruct((1, N * N), jnp.float32),
        in_specs=_vmem_specs(5),
        out_specs=pl.BlockSpec(memory_space=pltpu.MemorySpace.VMEM),
    )(params['latent'], params['W_a0'], params['b_a0'],
      params['W_a1'], params['b_a1'])
    return a.reshape(N, N)


def prepare_model(params, cfg, batch_size):
    """One-time (per parameter set / batch size) prep hoisted out of the
    per-input path: adjacency + normalization, block-diag expansion, node
    averaging matrix, graph-weight stacking, gamma/beta tiling."""
    N = cfg['node_cnt']
    B = batch_size

    adj = compute_adjacency(params, cfg)                               # (N,N)
    deg = jnp.maximum(jnp.sum(adj, axis=-1, keepdims=True), 1.0)
    adj_n = adj / deg                                                  # row-normalized
    adj_bd = jnp.kron(jnp.eye(B, dtype=jnp.float32), adj_n)            # (BN,BN)
    pnode = jnp.kron(jnp.full((B, B), 1.0 / B, dtype=jnp.float32),
                     jnp.eye(N, dtype=jnp.float32))                    # (BN,BN)

    Wrel = jnp.stack([w for (w, _, _, _) in params['graph']])          # (G,L,L)
    Wroot = jnp.stack([w for (_, w, _, _) in params['graph']])         # (G,L,L)
    Gf = jnp.stack([jnp.tile(g, (B, 1)) for (_, _, g, _) in params['graph']])  # (G,BN,1)
    Bf = jnp.stack([jnp.tile(b, (B, 1)) for (_, _, _, b) in params['graph']])  # (G,BN,1)

    prep = dict(adj_bd=adj_bd, pnode=pnode,
                Wrel=Wrel, Wroot=Wroot, Gf=Gf, Bf=Bf)
    for k in ('W_e0', 'g_e', 'b_e', 'W_e1', 'be_e1',
              'W_d0', 'g_d', 'b_d', 'W_d1', 'be_d1'):
        prep[k] = params[k]
    return prep


def weighted_graph_model_forward(prep, x, cfg):
    """Per-input path: a single fused pallas_call."""
    B, N, D = x.shape
    L = cfg['node_latent_dim']
    G = cfg['num_graph_layers']
    BN = B * N

    kernel = functools.partial(fused_forward_kernel, G=G)
    xlat, recon = pl.pallas_call(
        kernel,
        out_shape=(jax.ShapeDtypeStruct((BN, L), jnp.float32),
                   jax.ShapeDtypeStruct((BN, D), jnp.float32)),
        in_specs=_vmem_specs(17),
        out_specs=(pl.BlockSpec(memory_space=pltpu.MemorySpace.VMEM),
                   pl.BlockSpec(memory_space=pltpu.MemorySpace.VMEM)),
    )(x.reshape(BN, D), prep['adj_bd'], prep['pnode'],
      prep['W_e0'], prep['g_e'], prep['b_e'], prep['W_e1'], prep['be_e1'],
      prep['Wrel'], prep['Wroot'], prep['Gf'], prep['Bf'],
      prep['W_d0'], prep['g_d'], prep['b_d'], prep['W_d1'], prep['be_d1'])

    return xlat.reshape(B, N, L), recon.reshape(B, N, D)


# ---------------------------------------------------------------------------
# Parameter initialization (deterministic, mirrors module __init__ shapes)
# ---------------------------------------------------------------------------
def init_params(key, cfg):
    D = cfg['node_dim']; N = cfg['node_cnt']
    H = cfg['node_hidden_dim']; L = cfg['node_latent_dim']
    E = cfg['adj_embedding_dim']; AH = cfg['adj_hidden_dim']
    G = cfg['num_graph_layers']

    keys = iter(jax.random.split(key, 32))
    u = lambda shape, lo=-0.1, hi=0.1: jax.random.uniform(
        next(keys), shape, jnp.float32, lo, hi)

    p = {}
    # NodeEncoder: Linear(D,H,no bias) -> ReLU -> BN(H) -> Linear(H,L)
    p['W_e0'] = u((D, H))
    p['g_e'] = jnp.ones((1, H), jnp.float32)
    p['b_e'] = jnp.zeros((1, H), jnp.float32)
    p['W_e1'] = u((H, L))
    p['be_e1'] = u((1, L))
    # NodeDecoder: Linear(L,H,no bias) -> ReLU -> BN(H) -> Linear(H,D)
    p['W_d0'] = u((L, H))
    p['g_d'] = jnp.ones((1, H), jnp.float32)
    p['b_d'] = jnp.zeros((1, H), jnp.float32)
    p['W_d1'] = u((H, D))
    p['be_d1'] = u((1, D))
    # AdjacencyModel (no embedding_dict path)
    p['latent'] = jax.random.uniform(next(keys), (1, E), jnp.float32, 0.0, 1.0)
    p['W_a0'] = u((E, AH))
    p['b_a0'] = u((1, AH))
    p['W_a1'] = u((AH, N * N))
    p['b_a1'] = u((1, N * N))
    # Graph layers: [DenseGraphConv(L,L,'mean',bias=False), ReLU, BN(N)] x G
    p['graph'] = []
    for _ in range(G):
        wrel = u((L, L))
        wroot = u((L, L))
        gg = jnp.ones((N, 1), jnp.float32)
        bg = jnp.zeros((N, 1), jnp.float32)
        p['graph'].append((wrel, wroot, gg, bg))
    return p


# ---------------------------------------------------------------------------
# Pure-JAX reference (same math) for a correctness check
# ---------------------------------------------------------------------------
def reference_forward(p, x, cfg):
    B, N, D = x.shape

    def bn_rows(h, g, b):
        m = h.mean(0, keepdims=True)
        v = ((h - m) ** 2).mean(0, keepdims=True)
        return (h - m) / jnp.sqrt(v + EPS) * g + b

    h = x.reshape(B * N, D)
    h = bn_rows(jax.nn.relu(h @ p['W_e0']), p['g_e'], p['b_e'])
    h = h @ p['W_e1'] + p['be_e1']
    xl = h.reshape(B, N, -1)

    a = jax.nn.relu(p['latent'] @ p['W_a0'] + p['b_a0'])
    m = a.mean(-1, keepdims=True)
    v = ((a - m) ** 2).mean(-1, keepdims=True)
    a = (a - m) / jnp.sqrt(v + EPS)
    a = a @ p['W_a1'] + p['b_a1']
    adj = a.reshape(N, N)

    xg = xl
    for (wrel, wroot, gg, bg) in p['graph']:
        agg = jnp.einsum('nm,bmf->bnf', adj, xg)
        deg = jnp.maximum(adj.sum(-1, keepdims=True), 1.0)
        agg = agg / deg[None]
        h = agg @ wrel + xg @ wroot
        h = jax.nn.relu(h)
        mean = h.mean(axis=(0, 2), keepdims=True)
        var = ((h - mean) ** 2).mean(axis=(0, 2), keepdims=True)
        xg = (h - mean) / jnp.sqrt(var + EPS) * gg[None] + bg[None]

    h = xg.reshape(B * N, -1)
    h = bn_rows(jax.nn.relu(h @ p['W_d0']), p['g_d'], p['b_d'])
    recon = (h @ p['W_d1'] + p['be_d1']).reshape(B, N, D)
    return xg, recon


if __name__ == "__main__":
    cfg = dict(
        node_dim=16,
        node_cnt=8,
        node_hidden_dim=32,
        node_latent_dim=32,
        node_num_layers=2,
        adj_embedding_dim=8,
        adj_hidden_dim=32,
        adj_num_layers=2,
        adj_embedding_dict=None,   # no-embedding path: latent param + InstanceNorm1d
        num_graph_layers=2,
    )
    B = 2
    key = jax.random.PRNGKey(0)
    k_param, k_x = jax.random.split(key)
    params = init_params(k_param, cfg)
    x = jax.random.normal(k_x, (B, cfg['node_cnt'], cfg['node_dim']), jnp.float32)

    # One-time prep (adjacency kernel, normalization, block-diag, weight packing).
    prep = jax.block_until_ready(prepare_model(params, cfg, B))

    # Per-input path: one fused pallas_call.
    fwd = jax.jit(lambda pr, xx: weighted_graph_model_forward(pr, xx, cfg))
    x_lat, recon = jax.block_until_ready(fwd(prep, x))

    x_lat_ref, recon_ref = reference_forward(params, x, cfg)

    assert x_lat.shape == (B, cfg['node_cnt'], cfg['node_latent_dim'])
    assert recon.shape == (B, cfg['node_cnt'], cfg['node_dim'])
    assert jnp.allclose(x_lat, x_lat_ref, atol=1e-3, rtol=1e-3)
    assert jnp.allclose(recon, recon_ref, atol=1e-3, rtol=1e-3)
    print("KERNEL_OK")
</pallas_src>

<mosaic_0001>
module attributes {stable_mosaic.version = 11 : i64} {
  func.func @adjacency_kernel(%arg0: memref<1x8xf32, #tpu.memory_space<vmem>>, %arg1: memref<8x32xf32, #tpu.memory_space<vmem>>, %arg2: memref<1x32xf32, #tpu.memory_space<vmem>>, %arg3: memref<32x64xf32, #tpu.memory_space<vmem>>, %arg4: memref<1x64xf32, #tpu.memory_space<vmem>>, %arg5: memref<1x64xf32, #tpu.memory_space<vmem>>) attributes {dimension_semantics = [], scalar_prefetch = 0 : i64, scratch_operands = 0 : i64, tpu.core_type = #tpu.core_type<tc>} {
    %c0 = arith.constant 0 : index
    %c0_0 = arith.constant 0 : index
    %0 = vector.load %arg0[%c0, %c0_0] : memref<1x8xf32, #tpu.memory_space<vmem>>, vector<1x8xf32>
    %c0_1 = arith.constant 0 : index
    %c0_2 = arith.constant 0 : index
    %1 = vector.load %arg1[%c0_1, %c0_2] : memref<8x32xf32, #tpu.memory_space<vmem>>, vector<8x32xf32>
    %cst = arith.constant dense<0.000000e+00> : vector<1x32xf32>
    %2 = tpu.matmul %0, %1, %cst {dimension_numbers = #tpu.dot_dimension_numbers<[1], [0], [0], [1], [0, 0, 1, 1], [], []>} : vector<1x8xf32>, vector<8x32xf32>, vector<1x32xf32> -> vector<1x32xf32>
    %c0_3 = arith.constant 0 : index
    %c0_4 = arith.constant 0 : index
    %3 = vector.load %arg2[%c0_3, %c0_4] : memref<1x32xf32, #tpu.memory_space<vmem>>, vector<1x32xf32>
    %4 = arith.addf %2, %3 : vector<1x32xf32>
    %cst_5 = arith.constant 0.000000e+00 : f32
    %5 = vector.broadcast %cst_5 : f32 to vector<1x32xf32>
    %6 = arith.maximumf %4, %5 : vector<1x32xf32>
    %cst_6 = arith.constant dense<0.000000e+00> : vector<1xf32>
    %7 = vector.multi_reduction <add>, %6, %cst_6 [1] : vector<1x32xf32> to vector<1xf32>
    %8 = vector.shape_cast %7 : vector<1xf32> to vector<1x1xf32>
    %cst_7 = arith.constant 3.200000e+01 : f32
    %9 = vector.broadcast %cst_7 : f32 to vector<1x1xf32>
    %10 = arith.divf %8, %9 : vector<1x1xf32>
    %11 = arith.mulf %6, %6 : vector<1x32xf32>
    %cst_8 = arith.constant dense<0.000000e+00> : vector<1xf32>
    %12 = vector.multi_reduction <add>, %11, %cst_8 [1] : vector<1x32xf32> to vector<1xf32>
    %13 = vector.shape_cast %12 : vector<1xf32> to vector<1x1xf32>
    %cst_9 = arith.constant 3.200000e+01 : f32
    %14 = vector.broadcast %cst_9 : f32 to vector<1x1xf32>
    %15 = arith.divf %13, %14 : vector<1x1xf32>
    %16 = arith.mulf %10, %10 : vector<1x1xf32>
    %17 = arith.subf %15, %16 : vector<1x1xf32>
    %cst_10 = arith.constant 0.000000e+00 : f32
    %18 = vector.broadcast %cst_10 : f32 to vector<1x1xf32>
    %19 = arith.maximumf %17, %18 : vector<1x1xf32>
    %20 = vector.broadcast %10 : vector<1x1xf32> to vector<1x32xf32>
    %21 = arith.subf %6, %20 : vector<1x32xf32>
    %cst_11 = arith.constant 9.99999974E-6 : f32
    %22 = vector.broadcast %cst_11 : f32 to vector<1x1xf32>
    %23 = arith.addf %19, %22 : vector<1x1xf32>
    %24 = math.rsqrt %23 : vector<1x1xf32>
    %25 = vector.broadcast %24 : vector<1x1xf32> to vector<1x32xf32>
    %26 = arith.mulf %21, %25 : vector<1x32xf32>
    %c0_12 = arith.constant 0 : index
    %c0_13 = arith.constant 0 : index
    %27 = vector.load %arg3[%c0_12, %c0_13] : memref<32x64xf32, #tpu.memory_space<vmem>>, vector<32x64xf32>
    %cst_14 = arith.constant dense<0.000000e+00> : vector<1x64xf32>
    %28 = tpu.matmul %26, %27, %cst_14 {dimension_numbers = #tpu.dot_dimension_numbers<[1], [0], [0], [1], [0, 0, 1, 1], [], []>} : vector<1x32xf32>, vector<32x64xf32>, vector<1x64xf32> -> vector<1x64xf32>
    %c0_15 = arith.constant 0 : index
    %c0_16 = arith.constant 0 : index
    %29 = vector.load %arg4[%c0_15, %c0_16] : memref<1x64xf32, #tpu.memory_space<vmem>>, vector<1x64xf32>
    %30 = arith.addf %28, %29 : vector<1x64xf32>
    %c0_17 = arith.constant 0 : index
    %c0_18 = arith.constant 0 : index
    %31 = vector.load %arg5[%c0_17, %c0_18] : memref<1x64xf32, #tpu.memory_space<vmem>>, vector<1x64xf32>
    tpu.vector_store %arg5[%c0_17, %c0_18], %30 {strides = array<i32>} : memref<1x64xf32, #tpu.memory_space<vmem>>, vector<1x64xf32>,
    return
  }
}

</mosaic_0001>

<llo_original>
// kernel: tpu_custom_call.1
$region0: #{tpu_custom_call.1}
  #allocation0 [shape = 'u32[]', space=smem, size = 0x4, offset = 0x4, fixed_abs, tag = 'smem constant byte address 0x4 - core index']
  #allocation1 [shape = 'u32[144,128]{1,0:T(1,128)}', space=vmem, size = 0x12000, scoped, tag = 'internal scratch']
  %s0 = inlined_call_operand.hbm [shape: f32[1,8], index: 0, kind: input, shape index: {}]
  %s1 = inlined_call_operand.hbm [shape: f32[8,32], index: 1, kind: input, shape index: {}]
  %s2 = inlined_call_operand.vmem [shape: f32[1,32], index: 2, kind: input, shape index: {}]
  %s3 = inlined_call_operand.hbm [shape: f32[32,64], index: 3, kind: input, shape index: {}]
  %s4 = inlined_call_operand.vmem [shape: f32[1,64], index: 4, kind: input, shape index: {}]
  %s5 = inlined_call_operand.hbm [shape: f32[1,64], index: 5, kind: output, shape index: {}]
  %s6 = sld [smem:[#allocation0]]
  $region42: #{tpu_custom_call.1} parent=0
    _
  %s8 = ssub.s32 1, %s6
  %s9 = scalar_select 0, %s8, %s6
  $region1: #{tpu_custom_call.1} parent=0
    #allocation2 [shape = 'u8[512]{0}', space=vmem, size = 0x400, scoped, tag = 'input window, operand 0, single buffered']
    #allocation3 [shape = 's32[1]{0}', space=sflag, size = 0x4, scoped, tag = 'scoped memory for tpu_custom_call.1']
    #allocation4 [shape = 's32[1]{0}', space=sflag, size = 0x4, scoped, tag = 'scoped memory for tpu_custom_call.1']
    #allocation5 [shape = 'u8[4096]{0}', space=vmem, size = 0x1000, scoped, tag = 'input window, operand 1, single buffered']
    #allocation6 [shape = 's32[1]{0}', space=sflag, size = 0x4, scoped, tag = 'scoped memory for tpu_custom_call.1']
    #allocation7 [shape = 'u8[16384]{0}', space=vmem, size = 0x4000, scoped, tag = 'input window, operand 3, single buffered']
    #allocation8 [shape = 'u8[512]{0}', space=vmem, size = 0x400, scoped, tag = 'output window, operand 0, single buffered']
    %10 = vsyncpa [#allocation3], 0
    %11 = vsyncpa [#allocation6], 0
    %12 = vsyncpa [#allocation4], 0
    // Predicated region
    $region2: #{tpu_custom_call.1} parent=1 // pred_check
      _
    $region3: #{tpu_custom_call.1} parent=1 // pred_check_branch
      %14 = sbr.rel (0) target = $region5
    $region4: #{tpu_custom_call.1} parent=1 // pred_region
      %s16 = ssub.s32 16, 16
      %17 = vsyncadd [#allocation3], %s16
      %s19 = sshll.u32 [#allocation2], 4
      %s20 = int_to_ptr.vmem [resolvable:$true] %s19
      %22 = dma.hbm_to_vmem [thread:$0]  %s0, 16, %s20, [#allocation3]
    $region5: #{tpu_custom_call.1} parent=1 // pred_fallthru
      _
    // Predicated region
    $region6: #{tpu_custom_call.1} parent=1 // pred_check
      _
    $region7: #{tpu_custom_call.1} parent=1 // pred_check_branch
      %24 = sbr.rel (0) target = $region9
    $region8: #{tpu_custom_call.1} parent=1 // pred_region
      %s26 = ssub.s32 128, 128
      %27 = vsyncadd [#allocation6], %s26
      %s29 = sshll.u32 [#allocation5], 4
      %s30 = int_to_ptr.vmem [resolvable:$true] %s29
      %32 = dma.hbm_to_vmem [thread:$0]  %s1, 128, %s30, [#allocation6]
    $region9: #{tpu_custom_call.1} parent=1 // pred_fallthru
      _
    // Predicated region
    $region10: #{tpu_custom_call.1} parent=1 // pred_check
      _
    $region11: #{tpu_custom_call.1} parent=1 // pred_check_branch
      %34 = sbr.rel (0) target = $region13
    $region12: #{tpu_custom_call.1} parent=1 // pred_region
      _
    $region13: #{tpu_custom_call.1} parent=1 // pred_fallthru
      _
    // Predicated region
    $region14: #{tpu_custom_call.1} parent=1 // pred_check
      _
    $region15: #{tpu_custom_call.1} parent=1 // pred_check_branch
      %36 = sbr.rel (0) target = $region17
    $region16: #{tpu_custom_call.1} parent=1 // pred_region
      %s38 = ssub.s32 512, 512
      %39 = vsyncadd [#allocation6], %s38
      %s40 = sshll.u32 [#allocation7], 4
      %s41 = int_to_ptr.vmem [resolvable:$true] %s40
      %46 = dma.hbm_to_vmem [thread:$0]  %s3, 512, %s41, [#allocation6], 128, 128, 8
    $region17: #{tpu_custom_call.1} parent=1 // pred_fallthru
      _
    // Predicated region
    $region18: #{tpu_custom_call.1} parent=1 // pred_check
      _
    $region19: #{tpu_custom_call.1} parent=1 // pred_check_branch
      %48 = sbr.rel (0) target = $region21
    $region20: #{tpu_custom_call.1} parent=1 // pred_region
      _
    $region21: #{tpu_custom_call.1} parent=1 // pred_fallthru
      _
    // Predicated region
    $region22: #{tpu_custom_call.1} parent=1 // pred_check
      _
    $region23: #{tpu_custom_call.1} parent=1 // pred_check_branch
      %50 = sbr.rel (0) target = $region25
    $region24: #{tpu_custom_call.1} parent=1 // pred_region
      %51 = dma.done [#allocation3], 16
    $region25: #{tpu_custom_call.1} parent=1 // pred_fallthru
      _
    // Predicated region
    $region26: #{tpu_custom_call.1} parent=1 // pred_check
      _
    $region27: #{tpu_custom_call.1} parent=1 // pred_check_branch
      %53 = sbr.rel (0) target = $region29
    $region28: #{tpu_custom_call.1} parent=1 // pred_region
      %54 = dma.done [#allocation6], 128
    $region29: #{tpu_custom_call.1} parent=1 // pred_fallthru
      _
    // Predicated region
    $region30: #{tpu_custom_call.1} parent=1 // pred_check
      _
    $region31: #{tpu_custom_call.1} parent=1 // pred_check_branch
      %56 = sbr.rel (0) target = $region33
    $region32: #{tpu_custom_call.1} parent=1 // pred_region
      %57 = dma.done [#allocation6], 512
    $region33: #{tpu_custom_call.1} parent=1 // pred_fallthru
      _
    %v58 = vld [vmem:[#allocation2] sm:$0x1]
    %v59 = vld [vmem:[#allocation5] sm:$0xff]
    %v60 = vld [vmem:[%s2] sm:$0x1]
    %vm61 = vcmask 64512
    %v63 = vsel %vm61, %v58, 0
    %65 = vmatprep.subr.mxu0 0.0
    %66 = vmatpush1.msra.mxu0 %v59
    %67 = vmatprep.subr.mxu0 0.0
    %68 = vmatpush1.msra.mxu0 0.0
    %69 = vmatprep.subr.mxu0 0.0
    %70 = vmatpush1.msra.mxu0 0.0
    %71 = vmatprep.subr.mxu0 0.0
    %72 = vmatpush1.msra.mxu0 0.0
    %73 = vmatprep.subr.mxu0 0.0
    %74 = vmatpush1.msra.mxu0 0.0
    %75 = vmatprep.subr.mxu0 0.0
    %76 = vmatpush1.msra.mxu0 0.0
    %77 = vmatprep.subr.mxu0 0.0
    %78 = vmatpush1.msra.mxu0 0.0
    %79 = vmatprep.subr.mxu0 0.0
    %80 = vmatpush1.msra.mxu0 0.0
    %81 = vmatprep.subr.mxu0 0.0
    %82 = vmatpush1.msra.mxu0 0.0
    %83 = vmatprep.subr.mxu0 0.0
    %84 = vmatpush1.msra.mxu0 0.0
    %85 = vmatprep.subr.mxu0 0.0
    %86 = vmatpush1.msra.mxu0 0.0
    %87 = vmatprep.subr.mxu0 0.0
    %88 = vmatpush1.msra.mxu0 0.0
    %89 = vmatprep.subr.mxu0 0.0
    %90 = vmatpush1.msra.mxu0 0.0
    %91 = vmatprep.subr.mxu0 0.0
    %92 = vmatpush1.msra.mxu0 0.0
    %93 = vmatprep.subr.mxu0 0.0
    %94 = vmatpush1.msra.mxu0 0.0
    %95 = vmatprep.subr.mxu0 0.0
    %96 = vmatpush1.msra.mxu0 0.0
    %97 = vmatprep.subr.mxu0 0.0
    %98 = vmatpush1.msra.mxu0 0.0
    %99 = vmatprep.subr.mxu0 0.0
    %100 = vmatpush1.msra.mxu0 0.0
    %101 = vmatprep.subr.mxu0 0.0
    %102 = vmatpush1.msra.mxu0 0.0
    %103 = vmatprep.subr.mxu0 0.0
    %104 = vmatpush1.msra.mxu0 0.0
    %105 = vmatprep.subr.mxu0 0.0
    %106 = vmatpush1.msra.mxu0 0.0
    %107 = vmatprep.subr.mxu0 0.0
    %108 = vmatpush1.msra.mxu0 0.0
    %109 = vmatprep.subr.mxu0 0.0
    %110 = vmatpush1.msra.mxu0 0.0
    %111 = vmatprep.subr.mxu0 0.0
    %112 = vmatpush1.msra.mxu0 0.0
    %113 = vmatprep.subr.mxu0 0.0
    %114 = vmatpush1.msra.mxu0 0.0
    %115 = vmatprep.subr.mxu0 0.0
    %116 = vmatpush1.msra.mxu0 0.0
    %117 = vmatprep.subr.mxu0 0.0
    %118 = vmatpush1.msra.mxu0 0.0
    %119 = vmatprep.subr.mxu0 0.0
    %120 = vmatpush1.msra.mxu0 0.0
    %121 = vmatprep.subr.mxu0 0.0
    %122 = vmatpush1.msra.mxu0 0.0
    %123 = vmatprep.subr.mxu0 0.0
    %124 = vmatpush1.msra.mxu0 0.0
    %125 = vmatprep.subr.mxu0 0.0
    %126 = vmatpush1.msra.mxu0 0.0
    %127 = vmatprep.subr.mxu0 0.0
    %128 = vmatpush1.msra.mxu0 0.0
    %129 = vmatprep.mubr.f32.mxu0 0.0
    %130 = vmatmul.mubr.f32.gmra.mrb[0].mxu0 %v63
    %v131 = vpop.f32.mrb[0].mxu0
    %v132 = vadd.f32 %v60, %v131
    %v133 = vpop.f32.mrb[0].mxu0
    %134 = vdwg.mxu0
    %v135 = vmax.f32 %v132, 0.0
    %vm136 = vcmask 253952
    %v137 = vsel %vm136, %v135, 0.0
    %138 = vadd.xlane.f32.xlu0 %v137
    %v139 = vpop.xlane.xlu0 %138
    %v140 = vrcp.pop 32.0
    %v141 = vmul.f32 %v139, %v140
    %v142 = vmul.f32 %v135, %v135
    %v143 = vsel %vm136, %v142, 0.0
    %144 = vadd.xlane.f32.xlu0 %v143
    %v145 = vpop.xlane.xlu0 %144
    %v146 = vmul.f32 %v145, %v140
    %v147 = vmul.f32 %v141, %v141
    %v148 = vsub.f32 %v146, %v147
    %v149 = vmax.f32 %v148, 0.0
    %v150 = vsub.f32 %v135, %v141
    %v151 = vadd.f32 %v149, 1e-05
    %v152 = vrsqrt.pop %v151
    %v153 = vmul.f32 %v150, %v152
    %v154 = vld [vmem:[#allocation7] sm:$0xff]
    %v155 = vld [vmem:[#allocation7 + $0x8] sm:$0xff]
    %v156 = vld [vmem:[#allocation7 + $0x10] sm:$0xff]
    %v157 = vld [vmem:[#allocation7 + $0x18] sm:$0xff]
    %v158 = vld [vmem:[%s4] sm:$0x1]
    %vm159 = vcmask 261120
    %v161 = vsel %vm159, %v153, 0
    %163 = vmatprep.subr.mxu0 0.0
    %164 = vmatpush1.msra.mxu0 %v154
    %165 = vmatprep.subr.mxu0 0.0
    %166 = vmatpush1.msra.mxu0 %v155
    %167 = vmatprep.subr.mxu0 0.0
    %168 = vmatpush1.msra.mxu0 %v156
    %169 = vmatprep.subr.mxu0 0.0
    %170 = vmatpush1.msra.mxu0 %v157
    %171 = vmatprep.subr.mxu0 0.0
    %172 = vmatpush1.msra.mxu0 0.0
    %173 = vmatprep.subr.mxu0 0.0
    %174 = vmatpush1.msra.mxu0 0.0
    %175 = vmatprep.subr.mxu0 0.0
    %176 = vmatpush1.msra.mxu0 0.0
    %177 = vmatprep.subr.mxu0 0.0
    %178 = vmatpush1.msra.mxu0 0.0
    %179 = vmatprep.subr.mxu0 0.0
    %180 = vmatpush1.msra.mxu0 0.0
    %181 = vmatprep.subr.mxu0 0.0
    %182 = vmatpush1.msra.mxu0 0.0
    %183 = vmatprep.subr.mxu0 0.0
    %184 = vmatpush1.msra.mxu0 0.0
    %185 = vmatprep.subr.mxu0 0.0
    %186 = vmatpush1.msra.mxu0 0.0
    %187 = vmatprep.subr.mxu0 0.0
    %188 = vmatpush1.msra.mxu0 0.0
    %189 = vmatprep.subr.mxu0 0.0
    %190 = vmatpush1.msra.mxu0 0.0
    %191 = vmatprep.subr.mxu0 0.0
    %192 = vmatpush1.msra.mxu0 0.0
    %193 = vmatprep.subr.mxu0 0.0
    %194 = vmatpush1.msra.mxu0 0.0
    %195 = vmatprep.subr.mxu0 0.0
    %196 = vmatpush1.msra.mxu0 0.0
    %197 = vmatprep.subr.mxu0 0.0
    %198 = vmatpush1.msra.mxu0 0.0
    %199 = vmatprep.subr.mxu0 0.0
    %200 = vmatpush1.msra.mxu0 0.0
    %201 = vmatprep.subr.mxu0 0.0
    %202 = vmatpush1.msra.mxu0 0.0
    %203 = vmatprep.subr.mxu0 0.0
    %204 = vmatpush1.msra.mxu0 0.0
    %205 = vmatprep.subr.mxu0 0.0
    %206 = vmatpush1.msra.mxu0 0.0
    %207 = vmatprep.subr.mxu0 0.0
    %208 = vmatpush1.msra.mxu0 0.0
    %209 = vmatprep.subr.mxu0 0.0
    %210 = vmatpush1.msra.mxu0 0.0
    %211 = vmatprep.subr.mxu0 0.0
    %212 = vmatpush1.msra.mxu0 0.0
    %213 = vmatprep.subr.mxu0 0.0
    %214 = vmatpush1.msra.mxu0 0.0
    %215 = vmatprep.subr.mxu0 0.0
    %216 = vmatpush1.msra.mxu0 0.0
    %217 = vmatprep.subr.mxu0 0.0
    %218 = vmatpush1.msra.mxu0 0.0
    %219 = vmatprep.subr.mxu0 0.0
    %220 = vmatpush1.msra.mxu0 0.0
    %221 = vmatprep.subr.mxu0 0.0
    %222 = vmatpush1.msra.mxu0 0.0
    %223 = vmatprep.subr.mxu0 0.0
    %224 = vmatpush1.msra.mxu0 0.0
    %225 = vmatprep.subr.mxu0 0.0
    %226 = vmatpush1.msra.mxu0 0.0
    %227 = vmatprep.mubr.f32.mxu0 0.0
    %228 = vmatmul.mubr.f32.gmra.mrb[0].mxu0 %v161
    %v229 = vpop.f32.mrb[0].mxu0
    %v230 = vadd.f32 %v158, %v229
    %v231 = vpop.f32.mrb[0].mxu0
    %232 = vdwg.mxu0
    %vm233 = vcmask 516096
    %234 = vst.msk [vmem:[#allocation8] sm:$0x1] %vm233, %v230
    // Predicated region
    $region34: #{tpu_custom_call.1} parent=1 // pred_check
      _
    $region35: #{tpu_custom_call.1} parent=1 // pred_check_branch
      %236 = sbr.rel (0) target = $region37
    $region36: #{tpu_custom_call.1} parent=1 // pred_region
      %s238 = ssub.s32 16, 16
      %239 = vsyncadd [#allocation4], %s238
      %s241 = sshll.u32 [#allocation8], 4
      %s242 = int_to_ptr.vmem [resolvable:$true] %s241
      %244 = dma.vmem_to_hbm [thread:$0]  %s242, 16, %s5, [#allocation4]
    $region37: #{tpu_custom_call.1} parent=1 // pred_fallthru
      _
    // Predicated region
    $region38: #{tpu_custom_call.1} parent=1 // pred_check
      _
    $region39: #{tpu_custom_call.1} parent=1 // pred_check_branch
      %246 = sbr.rel (0) target = $region41
    $region40: #{tpu_custom_call.1} parent=1 // pred_region
      %247 = dma.done [#allocation4], 16
    $region41: #{tpu_custom_call.1} parent=1 // pred_fallthru
      _
    %248 = vsyncpa [#allocation3], 1
    %249 = vsyncpa [#allocation6], 1
    %250 = vsyncpa [#allocation4], 1

</llo_original>
